<compile_context>
chip_gen: v6e
topology: v6e:2x2x1
jax: 0.10.0
libtpu: 0.0.40
codegen_flags: <defaults>
</compile_context>

<pallas_src>
import functools

import numpy as np
import jax
import jax.numpy as jnp
from jax import lax
from jax.experimental import pallas as pl
from jax.experimental.pallas import tpu as pltpu


def _round_up(x, m):
    return ((x + m - 1) // m) * m


def _choose_tile_rows(n):
    """Pick the row tile: minimize padded rows + per-step pipeline overhead."""
    best_tm, best_score = 8, None
    for tm in (8, 16, 32, 64, 128, 256):
        n_pad = _round_up(n, tm)
        grid = n_pad // tm
        score = n_pad + 32 * grid          # ~0.35 us/step ~= a few rows of work
        if best_score is None or score <= best_score:
            best_tm, best_score = tm, score
    return best_tm


def _hamming_loss_kernel(*refs, d, tm, gather_src,
                         lambda_1, lambda_2, lambda_3, margin, inv_n):
    if gather_src:
        src_ids, dst_ids, rhs_ref, out_ref, gath_i, gath_j = refs
    else:
        dst_ids, rhs_ref, out_ref, gath_j = refs
        src_ids = None
        gath_i = None

    i = pl.program_id(0)
    row0 = pl.multiple_of(i * tm, tm)

    # --- index gather: O(TM * Dp) row copies from the VMEM-resident RHS ------
    def gather_body(r, carry):
        j = dst_ids[row0 + r]                               # scalar from SMEM
        gath_j[pl.ds(r, 1), :] = rhs_ref[pl.ds(j, 1), :]
        if gather_src:
            s = src_ids[row0 + r]
            gath_i[pl.ds(r, 1), :] = rhs_ref[pl.ds(s, 1), :]
        return carry

    lax.fori_loop(0, tm, gather_body, 0)

    rows = rhs_ref[pl.ds(row0, tm), :]           # this tile's own rows (TM, Dp)
    g_j = gath_j[...]                            # [emb | y | 0] at dst rows
    g_i = gath_i[...] if gather_src else rows    # identity src: no gather

    y_i = g_i[:, d:d + 1]                        # (TM, 1)
    y_j = g_j[:, d:d + 1]
    y_rows = rows[:, d:d + 1]

    # distances over all packed columns minus the label column's contribution.
    delta = g_i - g_j
    dy = y_i - y_j
    distances = jnp.maximum(
        jnp.sum(delta * delta, axis=1, keepdims=True) - dy * dy, 0.0)

    same = (y_i == y_j).astype(jnp.float32)
    term_same = same * distances

    hinge = jnp.maximum(jnp.abs(dy) * margin - jnp.sqrt(distances + 1e-6), 0.0)
    term_diff = (1.0 - same) * hinge * hinge     # indicator_diff = 1 - same

    # label-zero term: sum(row^2) includes y^2, but it is gated where y == 0.
    self_sq = jnp.sum(rows * rows, axis=1, keepdims=True)
    term_zero = jnp.where(y_rows == 0.0, self_sq, 0.0)

    # Single fused reduction for all three terms; partial mean for this tile.
    partial = jnp.sum(lambda_1 * term_same
                      + lambda_2 * term_diff
                      + lambda_3 * term_zero) * inv_n

    # Lane-dense per-tile partial output (summed by the wrapper).
    out_ref[...] = jnp.full((1, 8, 128), partial, dtype=jnp.float32)


def multi_dim_hamming_loss(y_true, embeddings, src=None, dst=None, *,
                           lambda_1=1.0, lambda_2=1.0, lambda_3=1.0,
                           margin=1.0, perm_key=None, src_is_identity=None,
                           tile_rows=None):
    """Single-chromosome forward of MultiDimHammingLoss (default module path)."""
    n, d = embeddings.shape

    if src is None or dst is None:
        # PyTorch uses random.shuffle; here a deterministic permutation.
        key = perm_key if perm_key is not None else jax.random.PRNGKey(0)
        dst = jax.random.permutation(key, n).astype(jnp.int32)
        gather_src = False                       # src is the identity permutation
    else:
        if src_is_identity is not None:          # explicit static flag (jit-safe)
            gather_src = not bool(src_is_identity)
        else:
            try:                                 # skip src gather if src == arange(n)
                gather_src = not bool(
                    np.array_equal(np.asarray(src), np.arange(n)))
            except Exception:                    # traced src: keep the general path
                gather_src = True

    # ---- padding / tiling ---------------------------------------------------
    tm = tile_rows if tile_rows is not None else _choose_tile_rows(n)
    tm = max(8, _round_up(int(tm), 8))
    n_pad = _round_up(n, tm)
    dp = _round_up(d + 1, 128)                   # packed RHS width: [emb | y | 0]
    grid = n_pad // tm

    emb = embeddings.astype(jnp.float32)
    y = y_true.astype(jnp.float32).reshape(n)

    rhs = jnp.zeros((n_pad, dp), jnp.float32)
    rhs = rhs.at[:n, :d].set(emb)
    rhs = rhs.at[:n, d].set(y)
    if n_pad > n:
        rhs = rhs.at[n:, d].set(-1.0)            # nonzero sentinel: pad rows add 0

    pad_ids = jnp.arange(n_pad, dtype=jnp.int32)  # pad rows pair with themselves
    dst_full = pad_ids.at[:n].set(jnp.asarray(dst, jnp.int32).reshape(n))

    kernel = functools.partial(
        _hamming_loss_kernel,
        d=int(d), tm=int(tm), gather_src=bool(gather_src),
        lambda_1=float(lambda_1), lambda_2=float(lambda_2),
        lambda_3=float(lambda_3), margin=float(margin), inv_n=1.0 / float(n))

    n_gather = 2 if gather_src else 1
    scratch_shapes = [pltpu.VMEM((tm, dp), jnp.float32) for _ in range(n_gather)]

    # Explicit VMEM budget: resident RHS (double-buffered by the pipeline) +
    # gather scratch + lane-dense output, with headroom.
    rhs_bytes = n_pad * dp * 4
    need = 2 * rhs_bytes + n_gather * tm * dp * 4 + 2 * 8 * 128 * 4 + (1 << 20)
    vmem_limit = int(min(max(2 * need, 8 << 20), 100 << 20))

    cost = pl.CostEstimate(
        flops=int(8 * n_pad * dp),
        transcendentals=int(n_pad),
        bytes_accessed=int((1 + 2 * n_gather) * rhs_bytes
                           + n_gather * n_pad * 4 + grid * 8 * 128 * 4))

    grid_spec = pltpu.PrefetchScalarGridSpec(
        num_scalar_prefetch=(2 if gather_src else 1),
        grid=(grid,),
        in_specs=[pl.BlockSpec((n_pad, dp), lambda i, *_: (0, 0))],   # resident RHS
        out_specs=pl.BlockSpec((1, 8, 128), lambda i, *_: (i, 0, 0)),
        scratch_shapes=scratch_shapes)

    call = pl.pallas_call(
        kernel,
        out_shape=jax.ShapeDtypeStruct((grid, 8, 128), jnp.float32),
        grid_spec=grid_spec,
        compiler_params=pltpu.CompilerParams(
            dimension_semantics=("parallel",),
            vmem_limit_bytes=vmem_limit),
        cost_estimate=cost)

    if gather_src:
        src_full = pad_ids.at[:n].set(jnp.asarray(src, jnp.int32).reshape(n))
        partials = call(src_full, dst_full, rhs)
    else:
        # Fast path: src is the identity permutation; don't even pass it.
        partials = call(dst_full, rhs)

    return jnp.sum(partials[:, 0, 0])


def _reference_loss(y_true, embeddings, src, dst,
                    lambda_1=1.0, lambda_2=1.0, lambda_3=1.0, margin=1.0):
    y_true = y_true.astype(jnp.float32)
    embeddings = embeddings.astype(jnp.float32)
    y_i, y_j = y_true[src], y_true[dst]
    e_i, e_j = embeddings[src], embeddings[dst]
    distances = jnp.sum((e_i - e_j) ** 2, axis=1)
    same = (y_i == y_j).astype(jnp.float32)
    diff = (y_i != y_j).astype(jnp.float32)
    zero = (y_true == 0).astype(jnp.float32)
    label_margin = jnp.abs(y_i - y_j)
    term_same = same * distances
    term_diff = diff * jnp.maximum(label_margin * margin
                                   - jnp.sqrt(distances + 1e-6), 0.0) ** 2
    zero_dist = jnp.sum(embeddings ** 2, axis=1)
    term_zero = zero * zero_dist
    return (lambda_1 * term_same.mean() + lambda_2 * term_diff.mean()
            + lambda_3 * term_zero.mean())


if __name__ == "__main__":
    key = jax.random.PRNGKey(0)
    keys = jax.random.split(key, 9)

    # Case 1: default module layout — identity src, shuffled dst (fast path).
    N, D = 8, 32
    y_true = jax.random.randint(keys[0], (N,), 0, 4).astype(jnp.float32)
    embeddings = jax.random.normal(keys[1], (N, D), dtype=jnp.float32)
    src = jnp.arange(N, dtype=jnp.int32)
    dst = jax.random.permutation(keys[2], N).astype(jnp.int32)

    loss = multi_dim_hamming_loss(y_true, embeddings, src, dst,
                                  lambda_1=1.0, lambda_2=1.0,
                                  lambda_3=1.0, margin=1.0)
    loss = jax.block_until_ready(loss)
    ref = _reference_loss(y_true, embeddings, src, dst)
    assert jnp.allclose(loss, ref, rtol=1e-5, atol=1e-5), (loss, ref)

    # Case 2: general (non-identity) src and N not a multiple of 8 (padded path).
    N2, D2 = 10, 32
    y2 = jax.random.randint(keys[3], (N2,), 0, 3).astype(jnp.float32)
    e2 = jax.random.normal(keys[4], (N2, D2), dtype=jnp.float32)
    src2 = jnp.arange(N2, dtype=jnp.int32)[::-1]
    dst2 = jax.random.permutation(keys[5], N2).astype(jnp.int32)

    loss2 = multi_dim_hamming_loss(y2, e2, src2, dst2,
                                   lambda_2=0.5, margin=2.0)
    loss2 = jax.block_until_ready(loss2)
    ref2 = _reference_loss(y2, e2, src2, dst2, lambda_2=0.5, margin=2.0)
    assert jnp.allclose(loss2, ref2, rtol=1e-5, atol=1e-5), (loss2, ref2)

    # Case 3: multi-tile grid (forced tile_rows=8) exercising the parallel axis.
    N3, D3 = 24, 32
    y3 = jax.random.randint(keys[6], (N3,), 0, 5).astype(jnp.float32)
    e3 = jax.random.normal(keys[7], (N3, D3), dtype=jnp.float32)
    src3 = jnp.arange(N3, dtype=jnp.int32)
    dst3 = jax.random.permutation(keys[8], N3).astype(jnp.int32)

    loss3 = multi_dim_hamming_loss(y3, e3, src3, dst3, tile_rows=8)
    loss3 = jax.block_until_ready(loss3)
    ref3 = _reference_loss(y3, e3, src3, dst3)
    assert jnp.allclose(loss3, ref3, rtol=1e-5, atol=1e-5), (loss3, ref3)

    print("KERNEL_OK")
</pallas_src>

<mosaic_0001>
module attributes {stable_mosaic.version = 11 : i64} {
  func.func @_hamming_loss_kernel(%arg0: i32, %arg1: memref<8xi32, #tpu.memory_space<smem>>, %arg2: memref<8x128xf32, #tpu.memory_space<vmem>>, %arg3: memref<1x8x128xf32, #tpu.memory_space<vmem>>, %arg4: memref<8x128xf32, #tpu.memory_space<vmem>>) attributes {dimension_semantics = [#tpu.dimension_semantics<parallel>], iteration_bounds = array<i64: 1>, scalar_prefetch = 1 : i64, scratch_operands = 1 : i64, tpu.core_type = #tpu.core_type<tc>, window_params = [{pipeline_mode = #tpu.pipeline_mode<synchronous>, transform_indices = @transform_0, window_bounds = array<i64: 8, 128>}, {transform_indices = @transform_1, window_bounds = array<i64: 1, 8, 128>}]} {
    %c8_i32 = arith.constant 8 : i32
    %0 = arith.muli %arg0, %c8_i32 : i32
    %1 = tpu.assume_multiple %0, 8 : i32
    %c0_i32 = arith.constant 0 : i32
    %c8_i32_0 = arith.constant 8 : i32
    %2 = arith.addi %c0_i32, %c8_i32_0 : i32
    %c1_i32 = arith.constant 1 : i32
    scf.for %arg5 = %c0_i32 to %2 step %c1_i32  : i32 {
      %57 = arith.addi %1, %arg5 : i32
      %58 = arith.index_cast %57 : i32 to index
      %59 = memref.load %arg1[%58] : memref<8xi32, #tpu.memory_space<smem>>
      %60 = arith.index_cast %59 : i32 to index
      %c0_20 = arith.constant 0 : index
      %61 = vector.load %arg2[%60, %c0_20] : memref<8x128xf32, #tpu.memory_space<vmem>>, vector<1x128xf32>
      %62 = arith.index_cast %arg5 : i32 to index
      %c0_21 = arith.constant 0 : index
      %63 = vector.load %arg4[%62, %c0_21] : memref<8x128xf32, #tpu.memory_space<vmem>>, vector<1x128xf32>
      tpu.vector_store %arg4[%62, %c0_21], %61 {strides = array<i32>} : memref<8x128xf32, #tpu.memory_space<vmem>>, vector<1x128xf32>,
    }
    %c8_i32_1 = arith.constant 8 : i32
    %3 = arith.index_cast %1 : i32 to index
    %c0 = arith.constant 0 : index
    %4 = vector.load %arg2[%3, %c0] : memref<8x128xf32, #tpu.memory_space<vmem>>, vector<8x128xf32>
    %c0_2 = arith.constant 0 : index
    %c0_3 = arith.constant 0 : index
    %5 = vector.load %arg4[%c0_2, %c0_3] : memref<8x128xf32, #tpu.memory_space<vmem>>, vector<8x128xf32>
    %6 = vector.extract_strided_slice %4 {offsets = [0, 32], sizes = [8, 1], strides = [1, 1]} : vector<8x128xf32> to vector<8x1xf32>
    %7 = vector.extract_strided_slice %5 {offsets = [0, 32], sizes = [8, 1], strides = [1, 1]} : vector<8x128xf32> to vector<8x1xf32>
    %8 = vector.extract_strided_slice %4 {offsets = [0, 32], sizes = [8, 1], strides = [1, 1]} : vector<8x128xf32> to vector<8x1xf32>
    %9 = arith.subf %4, %5 : vector<8x128xf32>
    %10 = arith.subf %6, %7 : vector<8x1xf32>
    %11 = arith.mulf %9, %9 : vector<8x128xf32>
    %cst = arith.constant dense<0.000000e+00> : vector<8xf32>
    %12 = vector.multi_reduction <add>, %11, %cst [1] : vector<8x128xf32> to vector<8xf32>
    %13 = vector.shape_cast %12 : vector<8xf32> to vector<8x1xf32>
    %14 = arith.mulf %10, %10 : vector<8x1xf32>
    %15 = arith.subf %13, %14 : vector<8x1xf32>
    %cst_4 = arith.constant 0.000000e+00 : f32
    %16 = vector.broadcast %cst_4 : f32 to vector<8x1xf32>
    %17 = arith.maximumf %15, %16 : vector<8x1xf32>
    %18 = arith.cmpf oeq, %6, %7 : vector<8x1xf32>
    %19 = arith.extui %18 : vector<8x1xi1> to vector<8x1xi32>
    %20 = arith.sitofp %19 : vector<8x1xi32> to vector<8x1xf32>
    %21 = arith.mulf %20, %17 : vector<8x1xf32>
    %22 = math.absf %10 : vector<8x1xf32>
    %cst_5 = arith.constant 1.000000e+00 : f32
    %23 = vector.broadcast %cst_5 : f32 to vector<8x1xf32>
    %24 = arith.mulf %22, %23 : vector<8x1xf32>
    %cst_6 = arith.constant 9.99999997E-7 : f32
    %25 = vector.broadcast %cst_6 : f32 to vector<8x1xf32>
    %26 = arith.addf %17, %25 : vector<8x1xf32>
    %27 = math.sqrt %26 : vector<8x1xf32>
    %28 = arith.subf %24, %27 : vector<8x1xf32>
    %cst_7 = arith.constant 0.000000e+00 : f32
    %29 = vector.broadcast %cst_7 : f32 to vector<8x1xf32>
    %30 = arith.maximumf %28, %29 : vector<8x1xf32>
    %cst_8 = arith.constant 1.000000e+00 : f32
    %31 = vector.broadcast %cst_8 : f32 to vector<8x1xf32>
    %32 = arith.subf %31, %20 : vector<8x1xf32>
    %33 = arith.mulf %32, %30 : vector<8x1xf32>
    %34 = arith.mulf %33, %30 : vector<8x1xf32>
    %35 = arith.mulf %4, %4 : vector<8x128xf32>
    %cst_9 = arith.constant dense<0.000000e+00> : vector<8xf32>
    %36 = vector.multi_reduction <add>, %35, %cst_9 [1] : vector<8x128xf32> to vector<8xf32>
    %37 = vector.shape_cast %36 : vector<8xf32> to vector<8x1xf32>
    %cst_10 = arith.constant 0.000000e+00 : f32
    %38 = vector.broadcast %cst_10 : f32 to vector<8x1xf32>
    %39 = arith.cmpf oeq, %8, %38 : vector<8x1xf32>
    %cst_11 = arith.constant 0.000000e+00 : f32
    %40 = vector.broadcast %cst_11 : f32 to vector<8x1xf32>
    %41 = arith.select %39, %37, %40 : vector<8x1xi1>, vector<8x1xf32>
    %cst_12 = arith.constant 1.000000e+00 : f32
    %42 = vector.broadcast %cst_12 : f32 to vector<8x1xf32>
    %43 = arith.mulf %42, %21 : vector<8x1xf32>
    %cst_13 = arith.constant 1.000000e+00 : f32
    %44 = vector.broadcast %cst_13 : f32 to vector<8x1xf32>
    %45 = arith.mulf %44, %34 : vector<8x1xf32>
    %46 = arith.addf %43, %45 : vector<8x1xf32>
    %cst_14 = arith.constant 1.000000e+00 : f32
    %47 = vector.broadcast %cst_14 : f32 to vector<8x1xf32>
    %48 = arith.mulf %47, %41 : vector<8x1xf32>
    %49 = arith.addf %46, %48 : vector<8x1xf32>
    %50 = vector.shape_cast %49 : vector<8x1xf32> to vector<1x8x1xf32>
    %cst_15 = arith.constant dense<0.000000e+00> : vector<1xf32>
    %51 = vector.multi_reduction <add>, %50, %cst_15 [1, 2] : vector<1x8x1xf32> to vector<1xf32>
    %52 = vector.shape_cast %51 : vector<1xf32> to vector<1x1x1xf32>
    %53 = vector.extract %52[0, 0, 0] : f32 from vector<1x1x1xf32>
    %cst_16 = arith.constant 1.250000e-01 : f32
    %54 = arith.mulf %53, %cst_16 : f32
    %55 = vector.broadcast %54 : f32 to vector<1x8x128xf32>
    %c0_17 = arith.constant 0 : index
    %c0_18 = arith.constant 0 : index
    %c0_19 = arith.constant 0 : index
    %56 = vector.load %arg3[%c0_17, %c0_18, %c0_19] : memref<1x8x128xf32, #tpu.memory_space<vmem>>, vector<1x8x128xf32>
    tpu.vector_store %arg3[%c0_17, %c0_18, %c0_19], %55 {strides = array<i32>} : memref<1x8x128xf32, #tpu.memory_space<vmem>>, vector<1x8x128xf32>,
    return
  }
  func.func @transform_0(%arg0: i32, %arg1: memref<8xi32, #tpu.memory_space<smem>>) -> (i32, i32) {
    %c0_i32 = arith.constant 0 : i32
    %c0_i32_0 = arith.constant 0 : i32
    %c0_i32_1 = arith.constant 0 : i32
    return %c0_i32, %c0_i32_0 : i32, i32
  }
  func.func @transform_1(%arg0: i32, %arg1: memref<8xi32, #tpu.memory_space<smem>>) -> (i32, i32, i32) {
    %c0_i32 = arith.constant 0 : i32
    %c0_i32_0 = arith.constant 0 : i32
    %c0_i32_1 = arith.constant 0 : i32
    return %arg0, %c0_i32, %c0_i32_0 : i32, i32, i32
  }
}

</mosaic_0001>

<llo_original>
// kernel: tpu_custom_call.1
$region0: #{tpu_custom_call.1}
  #allocation0 [shape = 'u32[]', space=smem, size = 0x4, offset = 0x4, fixed_abs, tag = 'smem constant byte address 0x4 - core index']
  #allocation1 [shape = 'u32[144,128]{1,0:T(1,128)}', space=vmem, size = 0x12000, scoped, tag = 'internal scratch']
  #allocation2 [shape = 'f32[8,128]{1,0:T(8,128)}', space=vmem, size = 0x1000, scoped, tag = 'scratch operand']
  #allocation3 [shape = 's32[1]{0}', space=sflag, size = 0x4, scoped, tag = 'scoped memory for tpu_custom_call.1']
  #allocation4 [shape = 'u8[512]{0}', space=smem, size = 0x200, scoped, tag = 'prefetched SMEM operand 0']
  %s0 = inlined_call_operand.hbm [shape: s32[8], index: 0, kind: input, shape index: {}]
  %s1 = inlined_call_operand.hbm [shape: f32[8,128], index: 1, kind: input, shape index: {}]
  %s2 = inlined_call_operand.hbm [shape: f32[1,8,128], index: 2, kind: output, shape index: {}]
  %s3 = sld [smem:[#allocation0]]
  $region25: #{tpu_custom_call.1} parent=0
    _
  %s5 = ssub.s32 1, %s3
  %s6 = scalar_select 0, %s5, %s3
  %8 = dma.hbm_to_smem %s0, 16, [#allocation4], [#allocation3]
  %9 = dma.done [#allocation3], 16
  %10 = sfence
  $region1: #{tpu_custom_call.1} parent=0
    #allocation5 [shape = 'u8[4096]{0}', space=vmem, size = 0x1000, scoped, tag = 'input window, operand 1, single buffered']
    #allocation6 [shape = 's32[1]{0}', space=sflag, size = 0x4, scoped, tag = 'scoped memory for tpu_custom_call.1']
    #allocation7 [shape = 's32[1]{0}', space=sflag, size = 0x4, scoped, tag = 'scoped memory for tpu_custom_call.1']
    #allocation8 [shape = 'u8[4096]{0}', space=vmem, size = 0x1000, scoped, tag = 'output window, operand 0, single buffered']
    %11 = vsyncpa [#allocation6], 0
    %12 = vsyncpa [#allocation7], 0
    // Predicated region
    $region2: #{tpu_custom_call.1} parent=1 // pred_check
      _
    $region3: #{tpu_custom_call.1} parent=1 // pred_check_branch
      %14 = sbr.rel (0) target = $region5
    $region4: #{tpu_custom_call.1} parent=1 // pred_region
      %s16 = ssub.s32 128, 128
      %17 = vsyncadd [#allocation6], %s16
      %s19 = sshll.u32 [#allocation5], 4
      %s20 = int_to_ptr.vmem [resolvable:$true] %s19
      %22 = dma.hbm_to_vmem [thread:$0]  %s1, 128, %s20, [#allocation6]
    $region5: #{tpu_custom_call.1} parent=1 // pred_fallthru
      _
    // Predicated region
    $region6: #{tpu_custom_call.1} parent=1 // pred_check
      _
    $region7: #{tpu_custom_call.1} parent=1 // pred_check_branch
      %24 = sbr.rel (0) target = $region9
    $region8: #{tpu_custom_call.1} parent=1 // pred_region
      %25 = dma.done [#allocation6], 128
    $region9: #{tpu_custom_call.1} parent=1 // pred_fallthru
      _
    %s26 = smul.u32 0, 8
    loop: start=0, step=1, limit=8
    $region10: #{tpu_custom_call.1} parent=1 // loop_pre_header
      _
    $region11: #{tpu_custom_call.1} parent=1 // loop_header
      %s28 = sphi 0, %s32
      %p29 = scmp.ge.s32.totalorder %s28, 8
    $region12: #{tpu_custom_call.1} parent=1 // loop_header_branch
      %31 = sbr.rel (%p29) target = $region16
    $region13: #{tpu_custom_call.1} parent=1 // loop_body
      %s33 = sadd.s32 %s26, %s28
      %s34 = sld [smem:[#allocation4 + %s33]]
      %s35 = scalar_lea.vmem [#allocation5], %s34
      %v36 = vld [vmem:[%s35] sm:$0x1]
      %s37 = scalar_lea.vmem [#allocation2], %s28
      %38 = vst [vmem:[%s37] sm:$0x1] %v36
    $region14: #{tpu_custom_call.1} parent=1 // loop_footer
      %s32 = sadd.s32 1, %s28
    $region15: #{tpu_custom_call.1} parent=1 // loop_footer_branch
      %27 = sbr.rel target = $region11
    $region16: #{tpu_custom_call.1} parent=1 // loop_exit
      _
    %s39 = scalar_lea.vmem [#allocation5], %s26
    %v40 = vld [vmem:[%s39] sm:$0xff]
    %v41 = vld [vmem:[#allocation2] sm:$0xff]
    %v42 = vsub.f32 %v40, %v41
    %v43 = vmul.f32 %v42, %v42
    %44 = vadd.xlane.f32.xlu0 %v43
    %v45 = vpop.xlane.xlu0 %44
    %v46 = vsub.f32 %v45, %v43
    %v47 = vmax.f32 %v46, 0.0
    %vm48 = vcmp.eq.f32.partialorder %v40, %v41
    %v49 = vsel %vm48, 1, 0
    %v50 = vcvt.s32.f32 %v49
    %v51 = vmul.f32 %v50, %v47
    %v52 = vand.u32 2147483647, %v42
    %v53 = vadd.f32 %v47, 1e-06
    %v54 = vrsqrt.pop %v53
    %v55 = vmul.f32 %v53, %v54
    %vm56 = vcmp.eq.f32.partialorder %v53, inf
    %v57 = vsel %vm56, %v53, %v55
    %vm58 = vcmp.eq.f32.partialorder %v53, 0.0
    %v59 = vand.u32 %v53, 2147483648
    %v60 = vsel %vm58, %v59, %v57
    %v61 = vsub.f32 %v52, %v60
    %v62 = vmax.f32 %v61, 0.0
    %v63 = vsub.f32 1.0, %v50
    %v64 = vmul.f32 %v63, %v62
    %v65 = vmul.f32 %v64, %v62
    %v66 = vmul.f32 %v40, %v40
    %67 = vadd.xlane.f32.xlu0 %v66
    %v68 = vpop.xlane.xlu0 %67
    %vm69 = vcmp.eq.f32.partialorder %v40, 0.0
    %v70 = vsel %vm69, %v68, 0.0
    %v71 = vadd.f32 %v51, %v65
    %v72 = vadd.f32 %v71, %v70
    %74 = vrot.lane.b32.xlu0 %v72, 96
    %v75 = vpop.permute.xlu0 %74
    %vm77 = vcmask 7168
    %v78 = vsel %vm77, %v75, 0.0
    %79 = vadd.xlane.f32.xlu0 %v78
    %v80 = vpop.xlane.xlu0 %79
    %v81 = vrot.slane %v80, 4
    %v82 = vadd.f32 %v80, %v81
    %v83 = vrot.slane %v82, 2
    %v84 = vadd.f32 %v82, %v83
    %v85 = vrot.slane %v84, 1
    %v86 = vadd.f32 %v84, %v85
    %s87 = vtos %v86
    %s88 = smul.f32 %s87, 0.125
    %v89 = vstv %s88
    %90 = vst [vmem:[#allocation8] sm:$0xff] %v89
    // Predicated region
    $region17: #{tpu_custom_call.1} parent=1 // pred_check
      _
    $region18: #{tpu_custom_call.1} parent=1 // pred_check_branch
      %92 = sbr.rel (0) target = $region20
    $region19: #{tpu_custom_call.1} parent=1 // pred_region
      %s94 = ssub.s32 128, 128
      %95 = vsyncadd [#allocation7], %s94
      %s97 = sshll.u32 [#allocation8], 4
      %s98 = int_to_ptr.vmem [resolvable:$true] %s97
      %100 = dma.vmem_to_hbm [thread:$0]  %s98, 128, %s2, [#allocation7]
    $region20: #{tpu_custom_call.1} parent=1 // pred_fallthru
      _
    // Predicated region
    $region21: #{tpu_custom_call.1} parent=1 // pred_check
      _
    $region22: #{tpu_custom_call.1} parent=1 // pred_check_branch
      %102 = sbr.rel (0) target = $region24
    $region23: #{tpu_custom_call.1} parent=1 // pred_region
      %103 = dma.done [#allocation7], 128
    $region24: #{tpu_custom_call.1} parent=1 // pred_fallthru
      _
    %104 = vsyncpa [#allocation6], 1
    %105 = vsyncpa [#allocation7], 1

</llo_original>
